<compile_context>
chip_gen: v5e
topology: v5e:2x2
jax: 0.10.0
libtpu: 0.0.40
codegen_flags: <defaults>
</compile_context>

<pallas_src>
import functools
import math

import jax
import jax.numpy as jnp
from jax.experimental import pallas as pl
from jax.experimental.pallas import tpu as pltpu


_TARGET_BLOCK_BYTES = 4 * 1024 * 1024   # ~4 MiB per input block
_OUT_SUBLANES = 8
_VMEM_LIMIT_BYTES = 48 * 1024 * 1024    # fits v5e/v6e/v7x (under 64 MiB physical)


def _num_tensorcores() -> int:
    """Best-effort TensorCore count behind one visible JAX device."""
    try:
        kind = jax.devices()[0].device_kind.lower()
    except Exception:  # pragma: no cover
        return 1
    # Single-TC generations: v5e ("v5 lite"), v6e ("v6 lite").
    if "lite" in kind or "v5e" in kind or "v6e" in kind:
        return 1
    # Megacore (v4 / v5p) and v7x expose 2 TensorCores per device.
    if "v4" in kind or "v5p" in kind or "v7" in kind or "v5" in kind:
        return 2
    return 1


def _flat_2d_view(x):
    """Zero-copy lane-friendly 2-D view (never jnp.pad, never slice)."""
    total = math.prod(x.shape)
    for lanes in (512, 256, 128):
        if total % lanes == 0:
            return x.reshape(total // lanes, lanes)
    # Truly ragged element count: (prod(:-1), W) is still a free reshape and a
    # block whose dims equal the full array dims is always legal.
    return x.reshape(-1, x.shape[-1])


def _sq_diff_sum_kernel(y_ref, z_ref, o_ref, acc_ref, *,
                        tm, acc_rows, n_slices, valid_rows,
                        blocks_per_core, needs_mask):
    c = pl.program_id(0)   # core axis (parallel on multi-TC parts)
    i = pl.program_id(1)   # reduction axis over row blocks

    @pl.when(i == 0)
    def _():
        acc_ref[...] = jnp.zeros_like(acc_ref)

    def accumulate(masked, thresh=None):
        # Static-sliced adds into a small fixed accumulator (pure VPU work).
        for k in range(n_slices):
            lo = k * acc_rows
            d = (y_ref[lo:lo + acc_rows, :].astype(jnp.float32)
                 - z_ref[lo:lo + acc_rows, :].astype(jnp.float32))
            if masked:
                rows = jax.lax.broadcasted_iota(jnp.int32, d.shape, 0) + lo
                # Mask BEFORE squaring so stale VMEM NaN/Inf never accumulates.
                d = jnp.where(rows < thresh, d, 0.0)
            acc_ref[...] += d * d

    if needs_mask:
        g = c * blocks_per_core + i          # unclamped logical block index
        thresh = valid_rows - g * tm         # valid rows within this block

        @pl.when(thresh >= tm)               # fully in-range: cheap unmasked path
        def _():
            accumulate(False)

        @pl.when(jnp.logical_and(thresh > 0, thresh < tm))   # partial tail block
        def _():
            accumulate(True, thresh)
        # thresh <= 0: clamped duplicate block -> contributes nothing, skip.
    else:
        accumulate(False)

    @pl.when(i == pl.num_programs(1) - 1)
    def _():
        s = jnp.sum(acc_ref[...])            # one cross-lane reduce per core
        row = jax.lax.broadcasted_iota(jnp.int32, o_ref.shape, 0)
        col = jax.lax.broadcasted_iota(jnp.int32, o_ref.shape, 1)
        o_ref[...] = jnp.where((row == 0) & (col == 0), s, 0.0)


@jax.jit
def mse_loss(Y, Z):
    assert Y.shape == Z.shape
    assert Y.ndim >= 2, "need at least 2 dims (sum over last two)"
    shape = Y.shape
    total = math.prod(shape)
    n_leading = math.prod(shape[:-2]) if len(shape) > 2 else 1

    # Zero-copy 2-D views (same shape for both since Y.shape == Z.shape).
    y2 = _flat_2d_view(Y)
    z2 = _flat_2d_view(Z)
    M, lanes = y2.shape

    itemsize = max(jnp.dtype(Y.dtype).itemsize, jnp.dtype(Z.dtype).itemsize)
    rows_per_block = max(8, (_TARGET_BLOCK_BYTES // (lanes * itemsize)) // 256 * 256)
    tm = M if M <= rows_per_block else rows_per_block
    nb = -(-M // tm)                              # row blocks (reduction extent)

    num_cores = min(_num_tensorcores(), nb)       # 1 on v5e/v6e, 2 on v4/v5p/v7x
    nbpc = -(-nb // num_cores)                    # row blocks per core
    needs_mask = (num_cores * nbpc * tm != M)

    # Small fixed accumulator decoupled from the input tile.
    acc_rows = next((c for c in (256, 128, 64, 32, 16, 8) if tm % c == 0), tm)
    n_slices = tm // acc_rows

    def in_map(c, i):
        # Clamp fully-out-of-range logical blocks onto the last valid block;
        # their contribution is skipped/masked inside the kernel.
        return (jnp.minimum(c * nbpc + i, nb - 1), 0)

    kernel = functools.partial(
        _sq_diff_sum_kernel,
        tm=tm, acc_rows=acc_rows, n_slices=n_slices, valid_rows=M,
        blocks_per_core=nbpc, needs_mask=needs_mask)

    dim_sem = ((pltpu.PARALLEL if num_cores > 1 else pltpu.ARBITRARY),
               pltpu.ARBITRARY)

    bytes_in = total * (jnp.dtype(Y.dtype).itemsize + jnp.dtype(Z.dtype).itemsize)

    partials = pl.pallas_call(
        kernel,
        out_shape=jax.ShapeDtypeStruct((num_cores * _OUT_SUBLANES, 128),
                                       jnp.float32),
        grid_spec=pltpu.PrefetchScalarGridSpec(
            num_scalar_prefetch=0,
            grid=(num_cores, nbpc),
            in_specs=[
                pl.BlockSpec((tm, lanes), in_map),
                pl.BlockSpec((tm, lanes), in_map),
            ],
            out_specs=pl.BlockSpec((_OUT_SUBLANES, 128), lambda c, i: (c, 0)),
            scratch_shapes=[pltpu.VMEM((acc_rows, lanes), jnp.float32)],
        ),
        compiler_params=pltpu.CompilerParams(
            dimension_semantics=dim_sem,
            vmem_limit_bytes=_VMEM_LIMIT_BYTES,
        ),
        cost_estimate=pl.CostEstimate(
            flops=3 * total,
            transcendentals=0,
            bytes_accessed=bytes_in + num_cores * _OUT_SUBLANES * 128 * 4,
        ),
    )(y2, z2)

    total_sq = jnp.sum(partials)   # only the [8*c, 0] entries are non-zero
    return (total_sq / jnp.float32(n_leading)).astype(jnp.float32)


def _reference(Y, Z):
    return jnp.mean(jnp.sum((Y - Z) ** 2, axis=(-1, -2)))


if __name__ == "__main__":
    key = jax.random.PRNGKey(0)
    k1, k2, k3, k4, k5, k6 = jax.random.split(key, 6)

    # 1) Small NCHW case matching the PyTorch module's typical use (aligned).
    Y = jax.random.normal(k1, (2, 4, 16, 16), dtype=jnp.float32)
    Z = jax.random.normal(k2, (2, 4, 16, 16), dtype=jnp.float32)
    out = jax.block_until_ready(mse_loss(Y, Z))
    ref = _reference(Y, Z)
    assert jnp.allclose(out, ref, rtol=1e-5, atol=1e-5), (out, ref)

    # 2) Larger case: multi-block grid + partial last block (row mask),
    #    still a zero-copy lane-dense (M, 512) view (no jnp.pad).
    Y2 = jax.random.normal(k3, (4, 4, 320, 250), dtype=jnp.float32)
    Z2 = jax.random.normal(k4, (4, 4, 320, 250), dtype=jnp.float32)
    out2 = jax.block_until_ready(mse_loss(Y2, Z2))
    ref2 = _reference(Y2, Z2)
    assert jnp.allclose(out2, ref2, rtol=1e-4, atol=1e-4), (out2, ref2)

    # 3) Truly ragged element count (not divisible by 128) -> zero-copy
    #    (prod(:-1), W) fallback view, still no host-side copy.
    Y3 = jax.random.normal(k5, (3, 5, 31, 27), dtype=jnp.float32)
    Z3 = jax.random.normal(k6, (3, 5, 31, 27), dtype=jnp.float32)
    out3 = jax.block_until_ready(mse_loss(Y3, Z3))
    ref3 = _reference(Y3, Z3)
    assert jnp.allclose(out3, ref3, rtol=1e-4, atol=1e-4), (out3, ref3)

    # 4) bf16 inputs stay bf16 on the DMA path (f32 accumulate in-kernel).
    Yb = Y.astype(jnp.bfloat16)
    Zb = Z.astype(jnp.bfloat16)
    outb = jax.block_until_ready(mse_loss(Yb, Zb))
    refb = _reference(Yb.astype(jnp.float32), Zb.astype(jnp.float32))
    assert jnp.allclose(outb, refb, rtol=2e-2, atol=2e-2), (outb, refb)

    print("KERNEL_OK")
</pallas_src>

<mosaic_0001>
module attributes {stable_mosaic.version = 11 : i64} {
  func.func @_sq_diff_sum_kernel(%arg0: i32, %arg1: i32, %arg2: memref<4x512xf32, #tpu.memory_space<vmem>>, %arg3: memref<4x512xf32, #tpu.memory_space<vmem>>, %arg4: memref<8x128xf32, #tpu.memory_space<vmem>>, %arg5: memref<4x512xf32, #tpu.memory_space<vmem>>) attributes {dimension_semantics = [#tpu.dimension_semantics<arbitrary>, #tpu.dimension_semantics<arbitrary>], iteration_bounds = array<i64: 1, 1>, scalar_prefetch = 0 : i64, scratch_operands = 1 : i64, tpu.core_type = #tpu.core_type<tc>, window_params = [{transform_indices = @transform_0, window_bounds = array<i64: 4, 512>}, {transform_indices = @transform_1, window_bounds = array<i64: 4, 512>}, {transform_indices = @transform_2, window_bounds = array<i64: 8, 128>}]} {
    %c0_i32 = arith.constant 0 : i32
    %0 = arith.cmpi eq, %arg1, %c0_i32 : i32
    %1 = arith.extui %0 : i1 to i32
    %c0_i32_0 = arith.constant 0 : i32
    %2 = arith.cmpi ne, %1, %c0_i32_0 : i32
    scf.if %2 {
      %cst = arith.constant 0.000000e+00 : f32
      %13 = vector.broadcast %cst : f32 to vector<4x512xf32>
      %c0_10 = arith.constant 0 : index
      %c0_11 = arith.constant 0 : index
      %14 = vector.load %arg5[%c0_10, %c0_11] : memref<4x512xf32, #tpu.memory_space<vmem>>, vector<4x512xf32>
      tpu.vector_store %arg5[%c0_10, %c0_11], %13 {strides = array<i32>} : memref<4x512xf32, #tpu.memory_space<vmem>>, vector<4x512xf32>,
    } else {
    }
    %c0 = arith.constant 0 : index
    %c0_1 = arith.constant 0 : index
    %3 = vector.load %arg2[%c0, %c0_1] : memref<4x512xf32, #tpu.memory_space<vmem>>, vector<4x512xf32>
    %c0_2 = arith.constant 0 : index
    %c0_3 = arith.constant 0 : index
    %4 = vector.load %arg3[%c0_2, %c0_3] : memref<4x512xf32, #tpu.memory_space<vmem>>, vector<4x512xf32>
    %5 = arith.subf %3, %4 : vector<4x512xf32>
    %c0_4 = arith.constant 0 : index
    %c0_5 = arith.constant 0 : index
    %6 = vector.load %arg5[%c0_4, %c0_5] : memref<4x512xf32, #tpu.memory_space<vmem>>, vector<4x512xf32>
    %7 = arith.mulf %5, %5 : vector<4x512xf32>
    %8 = arith.addf %6, %7 : vector<4x512xf32>
    %c0_6 = arith.constant 0 : index
    %c0_7 = arith.constant 0 : index
    %9 = vector.load %arg5[%c0_6, %c0_7] : memref<4x512xf32, #tpu.memory_space<vmem>>, vector<4x512xf32>
    tpu.vector_store %arg5[%c0_6, %c0_7], %8 {strides = array<i32>} : memref<4x512xf32, #tpu.memory_space<vmem>>, vector<4x512xf32>,
    %c0_i32_8 = arith.constant 0 : i32
    %10 = arith.cmpi eq, %arg1, %c0_i32_8 : i32
    %11 = arith.extui %10 : i1 to i32
    %c0_i32_9 = arith.constant 0 : i32
    %12 = arith.cmpi ne, %11, %c0_i32_9 : i32
    scf.if %12 {
      %c0_10 = arith.constant 0 : index
      %c0_11 = arith.constant 0 : index
      %13 = vector.load %arg5[%c0_10, %c0_11] : memref<4x512xf32, #tpu.memory_space<vmem>>, vector<4x512xf32>
      %14 = vector.shape_cast %13 : vector<4x512xf32> to vector<1x4x512xf32>
      %cst = arith.constant dense<0.000000e+00> : vector<1xf32>
      %15 = vector.multi_reduction <add>, %14, %cst [1, 2] : vector<1x4x512xf32> to vector<1xf32>
      %16 = vector.shape_cast %15 : vector<1xf32> to vector<1x1x1xf32>
      %17 = vector.extract %16[0, 0, 0] : f32 from vector<1x1x1xf32>
      %18 = tpu.iota {dimensions = array<i32: 0>} : vector<8x128xi32>
      %19 = tpu.iota {dimensions = array<i32: 1>} : vector<8x128xi32>
      %c0_i32_12 = arith.constant 0 : i32
      %20 = vector.broadcast %c0_i32_12 : i32 to vector<8x128xi32>
      %21 = arith.cmpi eq, %18, %20 : vector<8x128xi32>
      %c0_i32_13 = arith.constant 0 : i32
      %22 = vector.broadcast %c0_i32_13 : i32 to vector<8x128xi32>
      %23 = arith.cmpi eq, %19, %22 : vector<8x128xi32>
      %24 = arith.andi %21, %23 : vector<8x128xi1>
      %cst_14 = arith.constant 0.000000e+00 : f32
      %25 = vector.broadcast %17 : f32 to vector<8x128xf32>
      %26 = vector.broadcast %cst_14 : f32 to vector<8x128xf32>
      %27 = arith.select %24, %25, %26 : vector<8x128xi1>, vector<8x128xf32>
      %c0_15 = arith.constant 0 : index
      %c0_16 = arith.constant 0 : index
      %28 = vector.load %arg4[%c0_15, %c0_16] : memref<8x128xf32, #tpu.memory_space<vmem>>, vector<8x128xf32>
      tpu.vector_store %arg4[%c0_15, %c0_16], %27 {strides = array<i32>} : memref<8x128xf32, #tpu.memory_space<vmem>>, vector<8x128xf32>,
    } else {
    }
    return
  }
  func.func @transform_0(%arg0: i32, %arg1: i32) -> (i32, i32) {
    %c1_i32 = arith.constant 1 : i32
    %0 = arith.muli %arg0, %c1_i32 : i32
    %1 = arith.addi %0, %arg1 : i32
    %c0_i32 = arith.constant 0 : i32
    %2 = arith.minsi %1, %c0_i32 : i32
    %c0_i32_0 = arith.constant 0 : i32
    %c0_i32_1 = arith.constant 0 : i32
    return %2, %c0_i32_0 : i32, i32
  }
  func.func @transform_1(%arg0: i32, %arg1: i32) -> (i32, i32) {
    %c1_i32 = arith.constant 1 : i32
    %0 = arith.muli %arg0, %c1_i32 : i32
    %1 = arith.addi %0, %arg1 : i32
    %c0_i32 = arith.constant 0 : i32
    %2 = arith.minsi %1, %c0_i32 : i32
    %c0_i32_0 = arith.constant 0 : i32
    %c0_i32_1 = arith.constant 0 : i32
    return %2, %c0_i32_0 : i32, i32
  }
  func.func @transform_2(%arg0: i32, %arg1: i32) -> (i32, i32) {
    %c0_i32 = arith.constant 0 : i32
    %c0_i32_0 = arith.constant 0 : i32
    return %arg0, %c0_i32 : i32, i32
  }
}

</mosaic_0001>

<llo_original>
// kernel: mse_loss.1
$region0: #{mse_loss.1}
  #allocation0 [shape = 'u32[]', space=smem, size = 0x4, offset = 0x4, fixed_abs, tag = 'smem constant byte address 0x4 - core index']
  #allocation1 [shape = 'u32[72,128]{1,0:T(1,128)}', space=vmem, size = 0x9000, scoped, tag = 'internal scratch']
  #allocation2 [shape = 'f32[4,512]{1,0:T(4,128)}', space=vmem, size = 0x2000, scoped, tag = 'scratch operand']
  %s0 = inlined_call_operand.vmem [shape: f32[4,512], index: 0, kind: input, shape index: {}]
  %s1 = inlined_call_operand.vmem [shape: f32[4,512], index: 1, kind: input, shape index: {}]
  %s2 = inlined_call_operand.vmem [shape: f32[8,128], index: 2, kind: output, shape index: {}]
  %s3 = sld [smem:[#allocation0]]
  $region26: #{mse_loss.1} parent=0
    _
  %s5 = ssub.s32 1, %s3
  %s6 = scalar_select 0, %s5, %s3
  // Predicated region
  $region2: #{mse_loss.1} parent=0 // pred_check
    _
  $region3: #{mse_loss.1} parent=0 // pred_check_branch
    %8 = sbr.rel (0) target = $region5
  $region4: #{mse_loss.1} parent=0 // pred_region
    %s9 = sadd.s32 0, 0
    %p10 = scmp.lt.s32.totalorder %s9, 0
    %s11 = scalar_select %p10, %s9, 0
    %p12 = scmp.lt.s32.totalorder %s11, 0
    %s13 = scalar_select %p12, %s11, 0
    %s14 = smul.addr %s13, 4
    %s15 = smul.addr %s14, 4
    %s16 = scalar_lea.vmem %s0, %s15
    %s17 = sadd.s32 0, 0
    %p18 = scmp.lt.s32.totalorder %s17, 0
    %s19 = scalar_select %p18, %s17, 0
  $region5: #{mse_loss.1} parent=0 // pred_fallthru
    _
  // Predicated region
  $region6: #{mse_loss.1} parent=0 // pred_check
    _
  $region7: #{mse_loss.1} parent=0 // pred_check_branch
    %21 = sbr.rel (0) target = $region9
  $region8: #{mse_loss.1} parent=0 // pred_region
    %s22 = sadd.s32 0, 0
    %p23 = scmp.lt.s32.totalorder %s22, 0
    %s24 = scalar_select %p23, %s22, 0
    %p25 = scmp.lt.s32.totalorder %s24, 0
    %s26 = scalar_select %p25, %s24, 0
    %s27 = smul.addr %s26, 4
    %s28 = smul.addr %s27, 4
    %s29 = scalar_lea.vmem %s1, %s28
    %s30 = sadd.s32 0, 0
    %p31 = scmp.lt.s32.totalorder %s30, 0
    %s32 = scalar_select %p31, %s30, 0
  $region9: #{mse_loss.1} parent=0 // pred_fallthru
    _
  %s33 = sadd.s32 0, 0
  %p34 = scmp.lt.s32.totalorder %s33, 0
  %s35 = scalar_select %p34, %s33, 0
  %p36 = scmp.lt.s32.totalorder %s35, 0
  %s37 = scalar_select %p36, %s35, 0
  %s38 = smul.addr %s37, 4
  %s39 = smul.addr %s38, 4
  %s40 = scalar_lea.vmem %s0, %s39
  %s41 = sadd.s32 0, 0
  %p42 = scmp.lt.s32.totalorder %s41, 0
  %s43 = scalar_select %p42, %s41, 0
  %p44 = scmp.lt.s32.totalorder %s43, 0
  %s45 = scalar_select %p44, %s43, 0
  %s46 = smul.addr %s45, 4
  %s47 = smul.addr %s46, 4
  %s48 = scalar_lea.vmem %s1, %s47
  %s49 = sadd.s32 0, 0
  %p50 = scmp.lt.s32.totalorder %s49, 0
  %s51 = scalar_select %p50, %s49, 0
  %p52 = scmp.lt.s32.totalorder %s51, 0
  %s53 = scalar_select %p52, %s51, 0
  %s54 = smul.addr %s53, 4
  %s55 = smul.addr %s54, 4
  %s56 = scalar_lea.vmem %s0, %s55
  %s57 = sadd.s32 0, 0
  %p58 = scmp.lt.s32.totalorder %s57, 0
  %s59 = scalar_select %p58, %s57, 0
  %s60 = sadd.s32 0, 0
  %p61 = scmp.lt.s32.totalorder %s60, 0
  %s62 = scalar_select %p61, %s60, 0
  %p63 = scmp.lt.s32.totalorder %s62, 0
  %s64 = scalar_select %p63, %s62, 0
  %s65 = smul.addr %s64, 4
  %s66 = smul.addr %s65, 4
  %s67 = scalar_lea.vmem %s1, %s66
  %s68 = sadd.s32 0, 0
  %p69 = scmp.lt.s32.totalorder %s68, 0
  %s70 = scalar_select %p69, %s68, 0
  %p71 = scmp.eq.s32.totalorder 0, 0
  // Predicated region
  $region10: #{mse_loss.1} parent=0 // pred_check
    %p72 = pneg %p71
  $region11: #{mse_loss.1} parent=0 // pred_check_branch
    %74 = sbr.rel (%p72) target = $region13
  $region12: #{mse_loss.1} parent=0 // pred_region
    %75 = vst [vmem:[#allocation2] sm:$0xff] 0.0
    %76 = vst [vmem:[#allocation2 + $0x8] sm:$0xff] 0.0
  $region13: #{mse_loss.1} parent=0 // pred_fallthru
    _
  %v77 = vld [vmem:[%s56] sm:$0xff]
  %v78 = vld [vmem:[%s56 + $0x8] sm:$0xff]
  %v79 = vld [vmem:[%s67] sm:$0xff]
  %v80 = vld [vmem:[%s67 + $0x8] sm:$0xff]
  %v81 = vsub.f32 %v77, %v79
  %v82 = vsub.f32 %v78, %v80
  %v83 = vld [vmem:[#allocation2] sm:$0xff]
  %v84 = vld [vmem:[#allocation2 + $0x8] sm:$0xff]
  %v85 = vmul.f32 %v81, %v81
  %v86 = vmul.f32 %v82, %v82
  %v87 = vadd.f32 %v83, %v85
  %v88 = vadd.f32 %v84, %v86
  %89 = vst [vmem:[#allocation2] sm:$0xff] %v87
  %90 = vst [vmem:[#allocation2 + $0x8] sm:$0xff] %v88
  // Predicated region
  $region14: #{mse_loss.1} parent=0 // pred_check
    %p91 = pneg %p71
  $region15: #{mse_loss.1} parent=0 // pred_check_branch
    %93 = sbr.rel (%p91) target = $region17
  $region16: #{mse_loss.1} parent=0 // pred_region
    %v94 = vld [vmem:[#allocation2] sm:$0xff]
    %v95 = vld [vmem:[#allocation2 + $0x8] sm:$0xff]
    %98 = vst [vmem:[#allocation1] ss:$2 sm:$0xff] %v94
    %s99 = scalar_lea.vmem [#allocation1], 16
    %100 = vst [vmem:[%s99] ss:$2 sm:$0xff] %v95
    %v101 = vld.sshfl [vmem:[#allocation1] sm:$0xff pattern:$0x75316420]
    %v102 = vld.sshfl [vmem:[#allocation1 + $0x8] sm:$0xff pattern:$0x75316420]
    %v103 = vld.sshfl [vmem:[#allocation1 + $0x10] sm:$0xff pattern:$0x75316420]
    %v104 = vld.sshfl [vmem:[#allocation1 + $0x18] sm:$0xff pattern:$0x75316420]
    %vm109 = vcmask 1043456
    %v110 = vsel %vm109, %v101, 0.0
    %v111 = vsel %vm109, %v102, 0.0
    %v112 = vadd.f32 %v110, %v111
    %v113 = vsel %vm109, %v103, 0.0
    %v114 = vadd.f32 %v112, %v113
    %v115 = vsel %vm109, %v104, 0.0
    %v116 = vadd.f32 %v114, %v115
    %117 = vadd.xlane.f32.xlu0 %v116
    %v118 = vpop.xlane.xlu0 %117
    %v119 = vrot.slane %v118, 4
    %v120 = vadd.f32 %v118, %v119
    %v121 = vrot.slane %v120, 2
    %v122 = vadd.f32 %v120, %v121
    %v123 = vrot.slane %v122, 1
    %v124 = vadd.f32 %v122, %v123
    %s125 = vtos %v124
    %v126 = vlaneseq
    %v127 = vshrl.u32 %v126, 7
    %v128 = vlaneseq
    %v129 = vand.u32 %v128, 127
    %vm130 = vcmp.eq.s32.totalorder %v127, 0
    %vm131 = vcmp.eq.s32.totalorder %v129, 0
    %vm132 = vmand %vm130, %vm131
    %v133 = vstv %s125
    %v134 = vsel %vm132, %v133, 0.0
    %135 = vst [vmem:[%s2] sm:$0xff] %v134
  $region17: #{mse_loss.1} parent=0 // pred_fallthru
    _
  // Predicated region
  $region18: #{mse_loss.1} parent=0 // pred_check
    _
  $region19: #{mse_loss.1} parent=0 // pred_check_branch
    %137 = sbr.rel (0) target = $region21
  $region20: #{mse_loss.1} parent=0 // pred_region
    _
  $region21: #{mse_loss.1} parent=0 // pred_fallthru
    _
  // Predicated region
  $region22: #{mse_loss.1} parent=0 // pred_check
    _
  $region23: #{mse_loss.1} parent=0 // pred_check_branch
    %139 = sbr.rel (0) target = $region25
  $region24: #{mse_loss.1} parent=0 // pred_region
    _
  $region25: #{mse_loss.1} parent=0 // pred_fallthru
    _

</llo_original>
